<compile_context>
chip_gen: v7x
topology: tpu7x:2x2x1
jax: 0.10.0
libtpu: 0.0.40
codegen_flags: <defaults>
</compile_context>

<pallas_src>
import jax
import jax.numpy as jnp
from jax.experimental import pallas as pl
from jax.experimental.pallas import tpu as pltpu


# --------------------------------------------------------------------------
# Helpers
# --------------------------------------------------------------------------
def _round_up(x, m):
    return (x + m - 1) // m * m


def _balanced_tile(dim, cap, align):
    """Largest ~balanced tile <= cap (rounded up to `align`) that minimizes padding."""
    n_tiles = -(-dim // cap)
    return _round_up(-(-dim // n_tiles), align)


def _vmem_budget_bytes():
    """Usable VMEM per chip generation (~3/4 of physical capacity)."""
    cap = 64 * 1024 * 1024
    try:
        info = pltpu.get_tpu_info()
        cap = int(getattr(info, "vmem_capacity_bytes", cap))
    except Exception:
        pass
    # ~96 MiB on v5e/v6e (128 MiB physical), ~48 MiB on v7x (64 MiB).
    return (cap // 4) * 3


def _select_tiles(M, K, N, budget_bytes, in_itemsize):
    """(tm, tk, tn): MXU/lane aligned, sized from the per-chip VMEM budget."""
    # Lane-dense N tiles, 256-aligned where possible (v6e/v7x MXU is 2x256x256).
    n_align = 256 if N > 128 else 128
    tn = _balanced_tile(N, 1024, n_align)
    # 16-row alignment: bf16 packs 16 rows per vreg sublane-wise.
    # Small output heads keep tm at 512 so the M axis still provides megacore
    # parallelism; wide heads get up to 1024 to cut W re-streaming further.
    tm_cap = 512 if N <= 256 else 1024
    tm = _balanced_tile(M, tm_cap, 16)

    kp_full = _round_up(K, 128)

    def fits(tk):
        # Double-buffered x / w input blocks + f32 output(-accumulator) block.
        return (2 * tm * tk * in_itemsize + 2 * tk * tn * in_itemsize
                + 2 * tm * tn * 4) <= budget_bytes

    if fits(kp_full):
        tk = kp_full            # single K tile -> reduction grid axis dropped
    else:
        tk = 2048
        while tk > 256 and not fits(tk):
            tk //= 2
    return tm, tk, tn


def _pad_cast(a, shape, dtype):
    """Cast (first) and zero-pad `a` to `shape`; both are no-ops if already matching."""
    if a.dtype != dtype:
        a = a.astype(dtype)
    pads = [(0, s - d) for d, s in zip(a.shape, shape)]
    if any(p for _, p in pads):
        a = jnp.pad(a, pads)
    return a


# --------------------------------------------------------------------------
# Kernels
# --------------------------------------------------------------------------
def _matmul_fullk_kernel(x_ref, w_ref, o_ref):
    """y = x @ w, whole K in one block (no reduction axis)."""
    o_ref[...] = jnp.dot(x_ref[...], w_ref[...],
                         preferred_element_type=jnp.float32)


def _matmul_bias_fullk_kernel(x_ref, w_ref, b_ref, o_ref):
    """y = x @ w + b, whole K in one block."""
    o_ref[...] = jnp.dot(x_ref[...], w_ref[...],
                         preferred_element_type=jnp.float32) + b_ref[...]


def _matmul_ktiled_kernel(x_ref, w_ref, o_ref):
    """y = x @ w; the f32 output block is the accumulator (resident across k)."""
    k = pl.program_id(2)

    @pl.when(k == 0)
    def _():
        o_ref[...] = jnp.zeros_like(o_ref)

    o_ref[...] += jnp.dot(x_ref[...], w_ref[...],
                          preferred_element_type=jnp.float32)


def _matmul_bias_ktiled_kernel(x_ref, w_ref, b_ref, o_ref):
    """y = x @ w + b; bias added once in the k==last epilogue."""
    k = pl.program_id(2)

    @pl.when(k == 0)
    def _():
        o_ref[...] = jnp.zeros_like(o_ref)

    o_ref[...] += jnp.dot(x_ref[...], w_ref[...],
                          preferred_element_type=jnp.float32)

    @pl.when(k == pl.num_programs(2) - 1)
    def _():
        o_ref[...] += b_ref[...]


def _write_stats(y, stats_ref):
    # Row 0 = column sums, row 1 = column sums of squares; rows 2..7 are
    # alignment padding (8 sublanes) so the stats block is (8,128)-tileable.
    stats_ref[...] = jnp.zeros_like(stats_ref)
    stats_ref[0:1, :] = jnp.sum(y, axis=0, keepdims=True)
    stats_ref[1:2, :] = jnp.sum(y * y, axis=0, keepdims=True)


def _matmul_stats_fullk_kernel(x_ref, w_ref, y_ref, stats_ref):
    """BN pass 1 (full K): y = x @ w, plus per-tile column sum / sum-of-squares."""
    y = jnp.dot(x_ref[...], w_ref[...], preferred_element_type=jnp.float32)
    y_ref[...] = y
    _write_stats(y, stats_ref)


def _matmul_stats_ktiled_kernel(x_ref, w_ref, y_ref, stats_ref):
    """BN pass 1 (K-tiled): accumulate into y; emit stats in the k==last epilogue."""
    k = pl.program_id(2)

    @pl.when(k == 0)
    def _():
        y_ref[...] = jnp.zeros_like(y_ref)

    y_ref[...] += jnp.dot(x_ref[...], w_ref[...],
                          preferred_element_type=jnp.float32)

    @pl.when(k == pl.num_programs(2) - 1)
    def _():
        _write_stats(y_ref[...], stats_ref)


def _scale_shift_kernel(y_ref, scale_ref, shift_ref, o_ref):
    """BN pass 2: o = y * scale + shift (per-feature broadcast)."""
    o_ref[...] = y_ref[...] * scale_ref[...] + shift_ref[...]


# --------------------------------------------------------------------------
# Wrappers
# --------------------------------------------------------------------------
def _linear_pallas(x, w, b, *, compute_dtype, tiles=None):
    """y = x @ w (+ b).  x:(M,K), w:(K,N), b:(N,) or None.  Output f32 (M,N)."""
    M, K = x.shape
    K2, N = w.shape
    assert K == K2, (x.shape, w.shape)

    budget = _vmem_budget_bytes()
    itemsize = jnp.dtype(compute_dtype).itemsize
    tm, tk, tn = _select_tiles(M, K, N, budget, itemsize) if tiles is None else tiles
    Mp, Kp, Np = _round_up(M, tm), _round_up(K, tk), _round_up(N, tn)
    n_k = Kp // tk

    x_p = _pad_cast(x, (Mp, Kp), compute_dtype)
    w_p = _pad_cast(w, (Kp, Np), compute_dtype)   # no-op if W is stored pre-cast/aligned
    has_bias = b is not None
    if has_bias:
        b_p = _pad_cast(b.reshape(1, N), (1, Np), jnp.float32)

    cost = pl.CostEstimate(
        flops=2 * Mp * Kp * Np, transcendentals=0,
        bytes_accessed=int(x_p.nbytes) + int(w_p.nbytes) + Mp * Np * 4)

    if n_k == 1:
        grid = (Mp // tm, Np // tn)
        dims = ("parallel", "parallel")
        x_spec = pl.BlockSpec((tm, tk), lambda i, j: (i, 0))
        w_spec = pl.BlockSpec((tk, tn), lambda i, j: (0, j))
        o_spec = pl.BlockSpec((tm, tn), lambda i, j: (i, j))
        b_spec = pl.BlockSpec((1, tn), lambda i, j: (0, j))
        kernel = _matmul_bias_fullk_kernel if has_bias else _matmul_fullk_kernel
    else:
        grid = (Mp // tm, Np // tn, n_k)
        dims = ("parallel", "parallel", "arbitrary")
        x_spec = pl.BlockSpec((tm, tk), lambda i, j, k: (i, k))
        w_spec = pl.BlockSpec((tk, tn), lambda i, j, k: (k, j))
        o_spec = pl.BlockSpec((tm, tn), lambda i, j, k: (i, j))
        b_spec = pl.BlockSpec((1, tn), lambda i, j, k: (0, j))
        kernel = _matmul_bias_ktiled_kernel if has_bias else _matmul_ktiled_kernel

    in_specs = [x_spec, w_spec] + ([b_spec] if has_bias else [])
    args = (x_p, w_p) + ((b_p,) if has_bias else ())

    y = pl.pallas_call(
        kernel,
        out_shape=jax.ShapeDtypeStruct((Mp, Np), jnp.float32),
        grid_spec=pltpu.PrefetchScalarGridSpec(
            num_scalar_prefetch=0, grid=grid,
            in_specs=in_specs, out_specs=o_spec),
        compiler_params=pltpu.CompilerParams(
            dimension_semantics=dims, vmem_limit_bytes=budget),
        cost_estimate=cost,
    )(*args)
    return y[:M, :N]


def _linear_bn_pallas(x, w, gamma, beta, *, eps, compute_dtype, tiles=None):
    """y = BatchNorm1d(x @ w), training-mode batch statistics. Two-pass scheme."""
    # TODO(synk): BatchNorm1d running_mean/running_var buffer updates (training
    # side effect) are not emitted; only the normalized output is returned.
    M, K = x.shape
    K2, N = w.shape
    assert K == K2, (x.shape, w.shape)

    budget = _vmem_budget_bytes()
    itemsize = jnp.dtype(compute_dtype).itemsize
    tm, tk, tn = _select_tiles(M, K, N, budget, itemsize) if tiles is None else tiles
    Mp, Kp, Np = _round_up(M, tm), _round_up(K, tk), _round_up(N, tn)
    m_tiles, n_tiles, n_k = Mp // tm, Np // tn, Kp // tk

    x_p = _pad_cast(x, (Mp, Kp), compute_dtype)
    w_p = _pad_cast(w, (Kp, Np), compute_dtype)

    # ---- pass 1: y = x @ w, plus per-(i,j)-tile column sum / sum-of-squares ----
    out_shape = (jax.ShapeDtypeStruct((Mp, Np), jnp.float32),
                 jax.ShapeDtypeStruct((m_tiles * 8, Np), jnp.float32))
    cost = pl.CostEstimate(
        flops=2 * Mp * Kp * Np + 3 * Mp * Np, transcendentals=0,
        bytes_accessed=int(x_p.nbytes) + int(w_p.nbytes) + Mp * Np * 4)

    if n_k == 1:
        grid = (m_tiles, n_tiles)
        dims = ("parallel", "parallel")
        in_specs = [pl.BlockSpec((tm, tk), lambda i, j: (i, 0)),
                    pl.BlockSpec((tk, tn), lambda i, j: (0, j))]
        out_specs = [pl.BlockSpec((tm, tn), lambda i, j: (i, j)),
                     pl.BlockSpec((8, tn), lambda i, j: (i, j))]
        kernel = _matmul_stats_fullk_kernel
    else:
        grid = (m_tiles, n_tiles, n_k)
        dims = ("parallel", "parallel", "arbitrary")
        in_specs = [pl.BlockSpec((tm, tk), lambda i, j, k: (i, k)),
                    pl.BlockSpec((tk, tn), lambda i, j, k: (k, j))]
        out_specs = [pl.BlockSpec((tm, tn), lambda i, j, k: (i, j)),
                     pl.BlockSpec((8, tn), lambda i, j, k: (i, j))]
        kernel = _matmul_stats_ktiled_kernel

    y_p, stats = pl.pallas_call(
        kernel,
        out_shape=out_shape,
        grid_spec=pltpu.PrefetchScalarGridSpec(
            num_scalar_prefetch=0, grid=grid,
            in_specs=in_specs, out_specs=out_specs),
        compiler_params=pltpu.CompilerParams(
            dimension_semantics=dims, vmem_limit_bytes=budget),
        cost_estimate=cost,
    )(x_p, w_p)

    # ---- tiny cross-tile reduction + affine fold (plain JAX, O(m_tiles*N)) ----
    stats = stats.reshape(m_tiles, 8, Np).sum(axis=0)   # row0 = sum, row1 = sumsq
    inv_m = 1.0 / float(M)                              # padded rows are exact zeros
    mean = stats[0] * inv_m
    # Single-pass E[y^2]-E[y]^2 (clamped); adequate for SimCLR-scale activations.
    var = jnp.maximum(stats[1] * inv_m - mean * mean, 0.0)
    g_p = _pad_cast(gamma.reshape(1, N), (1, Np), jnp.float32)
    bt_p = _pad_cast(beta.reshape(1, N), (1, Np), jnp.float32)
    scale = g_p * jax.lax.rsqrt(var + eps)              # (1, Np)
    shift = bt_p - mean[None, :] * scale                # (1, Np)

    # ---- pass 2: streaming normalize (read y once, write y once) ----
    y = pl.pallas_call(
        _scale_shift_kernel,
        out_shape=jax.ShapeDtypeStruct((Mp, Np), jnp.float32),
        grid_spec=pltpu.PrefetchScalarGridSpec(
            num_scalar_prefetch=0, grid=(m_tiles, n_tiles),
            in_specs=[pl.BlockSpec((tm, tn), lambda i, j: (i, j)),
                      pl.BlockSpec((1, tn), lambda i, j: (0, j)),
                      pl.BlockSpec((1, tn), lambda i, j: (0, j))],
            out_specs=pl.BlockSpec((tm, tn), lambda i, j: (i, j))),
        compiler_params=pltpu.CompilerParams(
            dimension_semantics=("parallel", "parallel"),
            vmem_limit_bytes=budget),
    )(y_p, scale, shift)
    return y[:M, :N]


def linear_layer_forward(x, w, b=None, gamma=None, beta=None, *, use_bn=False,
                         eps=1e-5, compute_dtype=jnp.bfloat16):
    """Pallas forward for LinearLayer.

    x: (B, in_features) float32
    w: (in_features, out_features)  -- torch weight transposed. Pre-cast it to
       `compute_dtype` (bf16) and keep K/N tile-aligned to skip the wrapper
       pad/cast HBM pass entirely.
    b: (out_features,) or None      (ignored when use_bn=True, as in torch)
    gamma/beta: (out_features,) when use_bn=True
    """
    if use_bn:
        return _linear_bn_pallas(x, w, gamma, beta, eps=eps,
                                 compute_dtype=compute_dtype)
    return _linear_pallas(x, w, b, compute_dtype=compute_dtype)


# --------------------------------------------------------------------------
# Demo / self-check
# --------------------------------------------------------------------------
if __name__ == "__main__":
    key = jax.random.PRNGKey(0)
    k_x, k_w, k_b = jax.random.split(key, 3)

    batch, in_features, out_features = 8, 32, 16

    # nn.Linear init is U(-1/sqrt(in), 1/sqrt(in)); reproduced deterministically.
    bound = 1.0 / jnp.sqrt(jnp.float32(in_features))
    x = jax.random.normal(k_x, (batch, in_features), dtype=jnp.float32)
    w = jax.random.uniform(k_w, (in_features, out_features), jnp.float32,
                           -bound, bound)
    b = jax.random.uniform(k_b, (out_features,), jnp.float32, -bound, bound)
    gamma = jnp.ones((out_features,), jnp.float32)   # BatchNorm1d weight init
    beta = jnp.zeros((out_features,), jnp.float32)   # BatchNorm1d bias init

    # Reference uses the same bf16-rounded MXU inputs (f32 accumulation);
    # pass compute_dtype=jnp.float32 if full f32 input precision is required.
    x_r = x.astype(jnp.bfloat16).astype(jnp.float32)
    w_r = w.astype(jnp.bfloat16).astype(jnp.float32)

    # use_bias=True, use_bn=False  ->  y = x @ W + b  (full-K, no reduction axis)
    y = jax.block_until_ready(linear_layer_forward(x, w, b, use_bn=False))
    assert y.shape == (batch, out_features)
    assert jnp.allclose(y, x_r @ w_r + b[None, :], atol=2e-3, rtol=2e-3), \
        "linear+bias mismatch"

    # use_bias=False path  ->  y = x @ W
    y_nb = jax.block_until_ready(linear_layer_forward(x, w, None, use_bn=False))
    assert jnp.allclose(y_nb, x_r @ w_r, atol=2e-3, rtol=2e-3), "linear mismatch"

    # use_bn=True: linear (no bias) followed by training-mode BatchNorm1d.
    y_bn = jax.block_until_ready(
        linear_layer_forward(x, w, gamma=gamma, beta=beta, use_bn=True))
    z = x_r @ w_r
    mu = z.mean(axis=0, keepdims=True)
    var = ((z - mu) ** 2).mean(axis=0, keepdims=True)
    y_bn_ref = (z - mu) / jnp.sqrt(var + 1e-5) * gamma + beta
    assert jnp.allclose(y_bn, y_bn_ref, atol=3e-3, rtol=3e-3), "linear+bn mismatch"

    # Also exercise the K-tiled accumulation kernels (forced small tiles, K=256).
    k_x2, k_w2 = jax.random.split(k_b, 2)
    K2 = 256
    x2 = jax.random.normal(k_x2, (batch, K2), dtype=jnp.float32)
    w2 = jax.random.uniform(k_w2, (K2, out_features), jnp.float32, -bound, bound)
    x2_r = x2.astype(jnp.bfloat16).astype(jnp.float32)
    w2_r = w2.astype(jnp.bfloat16).astype(jnp.float32)

    y2 = jax.block_until_ready(
        _linear_pallas(x2, w2, b, compute_dtype=jnp.bfloat16, tiles=(16, 128, 128)))
    assert jnp.allclose(y2, x2_r @ w2_r + b[None, :], atol=2e-3, rtol=2e-3), \
        "k-tiled linear+bias mismatch"

    y2_bn = jax.block_until_ready(
        _linear_bn_pallas(x2, w2, gamma, beta, eps=1e-5,
                          compute_dtype=jnp.bfloat16, tiles=(16, 128, 128)))
    z2 = x2_r @ w2_r
    mu2 = z2.mean(axis=0, keepdims=True)
    var2 = ((z2 - mu2) ** 2).mean(axis=0, keepdims=True)
    ref2 = (z2 - mu2) / jnp.sqrt(var2 + 1e-5) * gamma + beta
    assert jnp.allclose(y2_bn, ref2, atol=3e-3, rtol=3e-3), "k-tiled linear+bn mismatch"

    print("KERNEL_OK")
</pallas_src>

<mosaic_0001>
module attributes {stable_mosaic.version = 11 : i64} {
  func.func @_matmul_bias_fullk_kernel(%arg0: i32, %arg1: i32, %arg2: memref<16x128xbf16, #tpu.memory_space<vmem>>, %arg3: memref<128x128xbf16, #tpu.memory_space<vmem>>, %arg4: memref<1x128xf32, #tpu.memory_space<vmem>>, %arg5: memref<16x128xf32, #tpu.memory_space<vmem>>) attributes {dimension_semantics = [#tpu.dimension_semantics<parallel>, #tpu.dimension_semantics<parallel>], iteration_bounds = array<i64: 1, 1>, scalar_prefetch = 0 : i64, scratch_operands = 0 : i64, tpu.core_type = #tpu.core_type<tc>, window_params = [{transform_indices = @transform_0, window_bounds = array<i64: 16, 128>}, {transform_indices = @transform_1, window_bounds = array<i64: 128, 128>}, {transform_indices = @transform_2, window_bounds = array<i64: 1, 128>}, {transform_indices = @transform_3, window_bounds = array<i64: 16, 128>}]} {
    %c0 = arith.constant 0 : index
    %c0_0 = arith.constant 0 : index
    %0 = vector.load %arg2[%c0, %c0_0] : memref<16x128xbf16, #tpu.memory_space<vmem>>, vector<16x128xbf16>
    %c0_1 = arith.constant 0 : index
    %c0_2 = arith.constant 0 : index
    %1 = vector.load %arg3[%c0_1, %c0_2] : memref<128x128xbf16, #tpu.memory_space<vmem>>, vector<128x128xbf16>
    %cst = arith.constant dense<0.000000e+00> : vector<16x128xf32>
    %2 = tpu.matmul %0, %1, %cst {dimension_numbers = #tpu.dot_dimension_numbers<[1], [0], [0], [1], [0, 0, 1, 1], [], []>} : vector<16x128xbf16>, vector<128x128xbf16>, vector<16x128xf32> -> vector<16x128xf32>
    %c0_3 = arith.constant 0 : index
    %c0_4 = arith.constant 0 : index
    %3 = vector.load %arg4[%c0_3, %c0_4] : memref<1x128xf32, #tpu.memory_space<vmem>>, vector<1x128xf32>
    %4 = vector.broadcast %3 : vector<1x128xf32> to vector<16x128xf32>
    %5 = arith.addf %2, %4 : vector<16x128xf32>
    %c0_5 = arith.constant 0 : index
    %c0_6 = arith.constant 0 : index
    %6 = vector.load %arg5[%c0_5, %c0_6] : memref<16x128xf32, #tpu.memory_space<vmem>>, vector<16x128xf32>
    tpu.vector_store %arg5[%c0_5, %c0_6], %5 {strides = array<i32>} : memref<16x128xf32, #tpu.memory_space<vmem>>, vector<16x128xf32>,
    return
  }
  func.func @transform_0(%arg0: i32, %arg1: i32) -> (i32, i32) {
    %c0_i32 = arith.constant 0 : i32
    %c0_i32_0 = arith.constant 0 : i32
    return %arg0, %c0_i32 : i32, i32
  }
  func.func @transform_1(%arg0: i32, %arg1: i32) -> (i32, i32) {
    %c0_i32 = arith.constant 0 : i32
    %c0_i32_0 = arith.constant 0 : i32
    return %c0_i32, %arg1 : i32, i32
  }
  func.func @transform_2(%arg0: i32, %arg1: i32) -> (i32, i32) {
    %c0_i32 = arith.constant 0 : i32
    %c0_i32_0 = arith.constant 0 : i32
    return %c0_i32, %arg1 : i32, i32
  }
  func.func @transform_3(%arg0: i32, %arg1: i32) -> (i32, i32) {
    %c0_i32 = arith.constant 0 : i32
    return %arg0, %arg1 : i32, i32
  }
}

</mosaic_0001>

<llo_original>
// kernel: tpu_custom_call.1
$region0: #{tpu_custom_call.1}
  #allocation0 [shape = 'u32[]', space=smem, size = 0x4, offset = 0x4, fixed_abs, tag = 'smem constant byte address 0x4 - core index']
  #allocation1 [shape = 'u32[144,128]{1,0:T(1,128)}', space=vmem, size = 0x12000, scoped, tag = 'internal scratch']
  %s0 = inlined_call_operand.hbm [shape: bf16[16,128], index: 0, kind: input, shape index: {}]
  %s1 = inlined_call_operand.hbm [shape: bf16[128,128], index: 1, kind: input, shape index: {}]
  %s2 = inlined_call_operand.vmem [shape: f32[1,128], index: 2, kind: input, shape index: {}]
  %s3 = inlined_call_operand.hbm [shape: f32[16,128], index: 3, kind: output, shape index: {}]
  %s4 = sld [smem:[#allocation0]]
  $region30: #{tpu_custom_call.1} parent=0
    _
  %s6 = ssub.s32 1, %s4
  %s7 = scalar_select 0, %s6, %s4
  $region1: #{tpu_custom_call.1} parent=0
    #allocation2 [shape = 'u8[4096]{0}', space=vmem, size = 0x1000, scoped, tag = 'input window, operand 0, single buffered']
    #allocation3 [shape = 's32[1]{0}', space=sflag, size = 0x4, scoped, tag = 'scoped memory for tpu_custom_call.1']
    #allocation4 [shape = 's32[1]{0}', space=sflag, size = 0x4, scoped, tag = 'scoped memory for tpu_custom_call.1']
    #allocation5 [shape = 'u8[32768]{0}', space=vmem, size = 0x8000, scoped, tag = 'input window, operand 1, single buffered']
    #allocation6 [shape = 's32[1]{0}', space=sflag, size = 0x4, scoped, tag = 'scoped memory for tpu_custom_call.1']
    #allocation7 [shape = 'u8[8192]{0}', space=vmem, size = 0x2000, scoped, tag = 'output window, operand 0, single buffered']
    %8 = vsyncpa [#allocation3], 0
    %9 = vsyncpa [#allocation6], 0
    %10 = vsyncpa [#allocation4], 0
    // Predicated region
    $region2: #{tpu_custom_call.1} parent=1 // pred_check
      _
    $region3: #{tpu_custom_call.1} parent=1 // pred_check_branch
      %12 = sbr.rel (0) target = $region5
    $region4: #{tpu_custom_call.1} parent=1 // pred_region
      %s14 = ssub.s32 128, 128
      %15 = vsyncadd [#allocation3], %s14
      %s16 = sshll.u32 [#allocation2], 4
      %s17 = int_to_ptr.vmem [resolvable:$true] %s16
      %22 = dma.hbm_to_vmem [thread:$0]  %s0, 128, %s17, [#allocation3], 64, 64, 4
    $region5: #{tpu_custom_call.1} parent=1 // pred_fallthru
      _
    // Predicated region
    $region6: #{tpu_custom_call.1} parent=1 // pred_check
      _
    $region7: #{tpu_custom_call.1} parent=1 // pred_check_branch
      %24 = sbr.rel (0) target = $region9
    $region8: #{tpu_custom_call.1} parent=1 // pred_region
      %s26 = ssub.s32 1024, 1024
      %27 = vsyncadd [#allocation6], %s26
      %s28 = sshll.u32 [#allocation5], 4
      %s29 = int_to_ptr.vmem [resolvable:$true] %s28
      %34 = dma.hbm_to_vmem [thread:$0]  %s1, 1024, %s29, [#allocation6], 64, 64, 4
    $region9: #{tpu_custom_call.1} parent=1 // pred_fallthru
      _
    // Predicated region
    $region10: #{tpu_custom_call.1} parent=1 // pred_check
      _
    $region11: #{tpu_custom_call.1} parent=1 // pred_check_branch
      %36 = sbr.rel (0) target = $region13
    $region12: #{tpu_custom_call.1} parent=1 // pred_region
      _
    $region13: #{tpu_custom_call.1} parent=1 // pred_fallthru
      _
    // Predicated region
    $region14: #{tpu_custom_call.1} parent=1 // pred_check
      _
    $region15: #{tpu_custom_call.1} parent=1 // pred_check_branch
      %38 = sbr.rel (0) target = $region17
    $region16: #{tpu_custom_call.1} parent=1 // pred_region
      %39 = dma.done [#allocation3], 128
    $region17: #{tpu_custom_call.1} parent=1 // pred_fallthru
      _
    // Predicated region
    $region18: #{tpu_custom_call.1} parent=1 // pred_check
      _
    $region19: #{tpu_custom_call.1} parent=1 // pred_check_branch
      %41 = sbr.rel (0) target = $region21
    $region20: #{tpu_custom_call.1} parent=1 // pred_region
      %42 = dma.done [#allocation6], 1024
    $region21: #{tpu_custom_call.1} parent=1 // pred_fallthru
      _
    %v44 = vld [vmem:[#allocation2] sm:$0xf]
    %v45 = vld [vmem:[#allocation2 + $0x4] sm:$0xf]
    %v46 = vld [vmem:[#allocation5] sm:$0xf]
    %v47 = vld [vmem:[#allocation5 + $0x4] sm:$0xf]
    %v48 = vld [vmem:[#allocation5 + $0x8] sm:$0xf]
    %v49 = vld [vmem:[#allocation5 + $0xc] sm:$0xf]
    %v50 = vld [vmem:[#allocation5 + $0x10] sm:$0xf]
    %v51 = vld [vmem:[#allocation5 + $0x14] sm:$0xf]
    %v52 = vld [vmem:[#allocation5 + $0x18] sm:$0xf]
    %v53 = vld [vmem:[#allocation5 + $0x1c] sm:$0xf]
    %v54 = vld [vmem:[#allocation5 + $0x20] sm:$0xf]
    %v55 = vld [vmem:[#allocation5 + $0x24] sm:$0xf]
    %v56 = vld [vmem:[#allocation5 + $0x28] sm:$0xf]
    %v57 = vld [vmem:[#allocation5 + $0x2c] sm:$0xf]
    %v58 = vld [vmem:[#allocation5 + $0x30] sm:$0xf]
    %v59 = vld [vmem:[#allocation5 + $0x34] sm:$0xf]
    %v60 = vld [vmem:[#allocation5 + $0x38] sm:$0xf]
    %v61 = vld [vmem:[#allocation5 + $0x3c] sm:$0xf]
    %v62 = vld [vmem:[%s2] sm:$0x1]
    %v64 = vlaneseq
    %v65 = vshrl.u32 %v64, 7
    %v66 = vsub.s32 0, %v65
    %v67 = vrot.slane %v62, %v66
    %v71 = vunpack.c.l.b16 %v44
    %v72 = vunpack.c.l.b16 %v45
    %v73 = vpack.c.b16 %v72, %v71
    %v91 = vunpack.c.l.b16 %v46
    %v92 = vunpack.c.l.b16 %v47
    %v93 = vunpack.c.l.b16 %v48
    %v94 = vunpack.c.l.b16 %v49
    %v95 = vunpack.c.l.b16 %v50
    %v96 = vunpack.c.l.b16 %v51
    %v97 = vunpack.c.l.b16 %v52
    %v98 = vunpack.c.l.b16 %v53
    %v99 = vunpack.c.l.b16 %v54
    %v100 = vunpack.c.l.b16 %v55
    %v101 = vunpack.c.l.b16 %v56
    %v102 = vunpack.c.l.b16 %v57
    %v103 = vunpack.c.l.b16 %v58
    %v104 = vunpack.c.l.b16 %v59
    %v105 = vunpack.c.l.b16 %v60
    %v106 = vunpack.c.l.b16 %v61
    %v107 = vpack.c.b16 %v92, %v91
    %v108 = vpack.c.b16 %v94, %v93
    %v109 = vpack.c.b16 %v96, %v95
    %v110 = vpack.c.b16 %v98, %v97
    %v111 = vpack.c.b16 %v100, %v99
    %v112 = vpack.c.b16 %v102, %v101
    %v113 = vpack.c.b16 %v104, %v103
    %v114 = vpack.c.b16 %v106, %v105
    %123 = vmatprep.subr.bf16.mxu0 0
    %124 = vmatpush1.bf16.msra.mxu0 %v107
    %125 = vmatprep.subr.bf16.mxu0 0
    %126 = vmatpush1.bf16.msra.mxu0 %v108
    %127 = vmatprep.subr.bf16.mxu0 0
    %128 = vmatpush1.bf16.msra.mxu0 %v109
    %129 = vmatprep.subr.bf16.mxu0 0
    %130 = vmatpush1.bf16.msra.mxu0 %v110
    %131 = vmatprep.subr.bf16.mxu0 0
    %132 = vmatpush1.bf16.msra.mxu0 %v111
    %133 = vmatprep.subr.bf16.mxu0 0
    %134 = vmatpush1.bf16.msra.mxu0 %v112
    %135 = vmatprep.subr.bf16.mxu0 0
    %136 = vmatpush1.bf16.msra.mxu0 %v113
    %137 = vmatprep.subr.bf16.mxu0 0
    %138 = vmatpush1.bf16.msra.mxu0 %v114
    %139 = vmatprep.subr.bf16.mxu0 0
    %140 = vmatpush1.bf16.msra.mxu0 0
    %141 = vmatprep.subr.bf16.mxu0 0
    %142 = vmatpush1.bf16.msra.mxu0 0
    %143 = vmatprep.subr.bf16.mxu0 0
    %144 = vmatpush1.bf16.msra.mxu0 0
    %145 = vmatprep.subr.bf16.mxu0 0
    %146 = vmatpush1.bf16.msra.mxu0 0
    %147 = vmatprep.subr.bf16.mxu0 0
    %148 = vmatpush1.bf16.msra.mxu0 0
    %149 = vmatprep.subr.bf16.mxu0 0
    %150 = vmatpush1.bf16.msra.mxu0 0
    %151 = vmatprep.subr.bf16.mxu0 0
    %152 = vmatpush1.bf16.msra.mxu0 0
    %153 = vmatprep.subr.bf16.mxu0 0
    %154 = vmatpush1.bf16.msra.mxu0 0
    %155 = vmatprep.mubr.bf16.mxu0 0
    %156 = vmatmul.mubr.bf16.gmra.mrb[0].mxu0 %v73
    %v157 = vpop.f32.mrb[0].mxu0
    %v158 = vadd.f32 %v67, %v157
    %v159 = vpop.f32.mrb[0].mxu0
    %v160 = vpop.f32.mrb[0].mxu0
    %v161 = vadd.f32 %v67, %v160
    %v162 = vpop.f32.mrb[0].mxu0
    %163 = vdwg.mxu0
    %164 = vst [vmem:[#allocation7] sm:$0xff] %v158
    %165 = vst [vmem:[#allocation7 + $0x8] sm:$0xff] %v161
    // Predicated region
    $region22: #{tpu_custom_call.1} parent=1 // pred_check
      _
    $region23: #{tpu_custom_call.1} parent=1 // pred_check_branch
      %167 = sbr.rel (0) target = $region25
    $region24: #{tpu_custom_call.1} parent=1 // pred_region
      %s169 = ssub.s32 256, 256
      %170 = vsyncadd [#allocation4], %s169
      %s171 = sshll.u32 [#allocation7], 4
      %s172 = int_to_ptr.vmem [resolvable:$true] %s171
      %177 = dma.vmem_to_hbm [thread:$0]  %s172, 256, %s3, [#allocation4], 128, 128, 8
    $region25: #{tpu_custom_call.1} parent=1 // pred_fallthru
      _
    // Predicated region
    $region26: #{tpu_custom_call.1} parent=1 // pred_check
      _
    $region27: #{tpu_custom_call.1} parent=1 // pred_check_branch
      %179 = sbr.rel (0) target = $region29
    $region28: #{tpu_custom_call.1} parent=1 // pred_region
      %180 = dma.done [#allocation4], 256
    $region29: #{tpu_custom_call.1} parent=1 // pred_fallthru
      _
    %181 = vsyncpa [#allocation3], 1
    %182 = vsyncpa [#allocation6], 1
    %183 = vsyncpa [#allocation4], 1

</llo_original>
